<compile_context>
chip_gen: v7x
topology: tpu7x:2x2x1
jax: 0.10.0
libtpu: 0.0.40
codegen_flags: <defaults>
</compile_context>

<pallas_src>
import functools

import jax
import jax.numpy as jnp
from jax.experimental import pallas as pl
from jax.experimental.pallas import tpu as pltpu


def _normalnn_kernel(x_ref, w1_ref, b1_ref, w2_ref, b2_ref, wh_ref, bh_ref,
                     out_ref):
    # Backbone: two Linear + ReLU layers. bf16 operands on the MXU, f32 acc.
    x = x_ref[...]
    h1 = jnp.dot(x, w1_ref[...], preferred_element_type=jnp.float32) + b1_ref[...]
    h1 = jnp.maximum(h1, 0.0).astype(jnp.bfloat16)
    h2 = jnp.dot(h1, w2_ref[...], preferred_element_type=jnp.float32) + b2_ref[...]
    h2 = jnp.maximum(h2, 0.0).astype(jnp.bfloat16)
    # Fused multi-head logits: single lane-dense (256-wide) matmul + bias.
    out_ref[...] = (jnp.dot(h2, wh_ref[...], preferred_element_type=jnp.float32)
                    + bh_ref[...]).astype(out_ref.dtype)


def _round_up(n, m):
    return ((n + m - 1) // m) * m


def prepare_params(params):
    """One-time weight prep (hoisted out of the per-call jitted path).

    Fuses the two task heads into a single lane-aligned weight matrix:
    head-1 occupies lanes [0, out_dim1), head-2 occupies lanes
    [head2_lane, head2_lane + out_dim2) with head2_lane a multiple of 128,
    so both output slices are lane-aligned. Weights are cast to bf16 once.
    """
    w1, b1 = params["w1"], params["b1"]
    w2, b2 = params["w2"], params["b2"]
    wh1, bh1, wh2, bh2 = params["wh1"], params["bh1"], params["wh2"], params["bh2"]
    hidden = w1.shape[1]
    out_dim1 = wh1.shape[1]
    out_dim2 = wh2.shape[1]

    head2_lane = _round_up(max(out_dim1, 1), 128)          # 128 for out_dim1=10
    n_pad = _round_up(head2_lane + out_dim2, 128)          # 256: fills 2x256 MXU
    wh = jnp.zeros((hidden, n_pad), jnp.float32)
    wh = wh.at[:, :out_dim1].set(wh1).at[:, head2_lane:head2_lane + out_dim2].set(wh2)
    bh = jnp.zeros((1, n_pad), jnp.float32)
    bh = bh.at[:, :out_dim1].set(bh1).at[:, head2_lane:head2_lane + out_dim2].set(bh2)

    prepped = dict(
        w1=jnp.asarray(w1, jnp.bfloat16),
        b1=jnp.asarray(b1, jnp.float32),
        w2=jnp.asarray(w2, jnp.bfloat16),
        b2=jnp.asarray(b2, jnp.float32),
        wh=wh.astype(jnp.bfloat16),
        bh=bh,
    )
    prepped = jax.block_until_ready(prepped)   # pay the prep cost once, here
    meta = dict(out_dim1=out_dim1, out_dim2=out_dim2, head2_lane=head2_lane)
    return prepped, meta


@functools.partial(jax.jit,
                   static_argnames=("out_dim1", "out_dim2", "head2_lane"))
def normalnn_forward(x_nchw, prepped, *, out_dim1, out_dim2, head2_lane):
    """Runs the NormalNN multi-head forward. Returns {task: logits} (f32)."""
    B = x_nchw.shape[0]
    w1, b1 = prepped["w1"], prepped["b1"]
    w2, b2 = prepped["w2"], prepped["b2"]
    wh, bh = prepped["wh"], prepped["bh"]
    d_in, hidden = w1.shape
    n_pad = wh.shape[1]

    # x prep: flatten -> bf16 cast -> pad rows to 16 (covers f32 sublane=8 and
    # bf16 packing=16) so matmul rows / stores are unmasked. Padded in bf16.
    b_pad = max(16, _round_up(B, 16))
    x_bf = x_nchw.reshape(B, -1).astype(jnp.bfloat16)
    if b_pad != B:
        x_bf = jnp.pad(x_bf, ((0, b_pad - B), (0, 0)))

    flops = 2 * b_pad * (d_in * hidden + hidden * hidden + hidden * n_pad)
    bytes_accessed = (
        x_bf.size * 2 + w1.size * 2 + w2.size * 2 + wh.size * 2
        + b1.size * 4 + b2.size * 4 + bh.size * 4
        + b_pad * n_pad * 4)

    vmem = pl.BlockSpec(memory_space=pltpu.MemorySpace.VMEM)
    out_pad = pl.pallas_call(
        _normalnn_kernel,
        out_shape=jax.ShapeDtypeStruct((b_pad, n_pad), jnp.float32),
        in_specs=[vmem] * 7,
        out_specs=vmem,
        cost_estimate=pl.CostEstimate(
            flops=flops, transcendentals=0, bytes_accessed=bytes_accessed),
    )(x_bf, w1, b1, w2, b2, wh, bh)

    # Lane-aligned slices of the two task logits (plain JAX, fused by XLA).
    return {
        "1": out_pad[:B, :out_dim1],
        "2": out_pad[:B, head2_lane:head2_lane + out_dim2],
    }


def init_params(key, d_in, hidden, out_dims):
    """Deterministic synthetic parameter init (PyTorch-Linear-like scaling)."""
    ks = jax.random.split(key, 8)

    def lin(kw, kb, fan_in, fan_out):
        bound = 1.0 / jnp.sqrt(fan_in)
        w = jax.random.uniform(kw, (fan_in, fan_out), jnp.float32, -bound, bound)
        b = jax.random.uniform(kb, (1, fan_out), jnp.float32, -bound, bound)
        return w, b

    w1, b1 = lin(ks[0], ks[1], d_in, hidden)
    w2, b2 = lin(ks[2], ks[3], hidden, hidden)
    wh1, bh1 = lin(ks[4], ks[5], hidden, out_dims["1"])
    wh2, bh2 = lin(ks[6], ks[7], hidden, out_dims["2"])
    return dict(w1=w1, b1=b1, w2=w2, b2=b2, wh1=wh1, bh1=bh1, wh2=wh2, bh2=bh2)


def _reference_forward(x_nchw, params):
    """Pure-JAX f32 reference of the same forward (correctness check)."""
    x = x_nchw.reshape(x_nchw.shape[0], -1).astype(jnp.float32)
    h1 = jnp.maximum(x @ params["w1"] + params["b1"], 0.0)
    h2 = jnp.maximum(h1 @ params["w2"] + params["b2"], 0.0)
    return {
        "1": h2 @ params["wh1"] + params["bh1"],
        "2": h2 @ params["wh2"] + params["bh2"],
    }


if __name__ == "__main__":
    key = jax.random.PRNGKey(0)
    k_x, k_p = jax.random.split(key)

    # Small NCHW input: batch=2, channels=4, spatial=16x16.
    B, C, H, W = 2, 4, 16, 16
    x = jax.random.normal(k_x, (B, C, H, W), jnp.float32)

    d_in = C * H * W          # 1024
    hidden = 128
    out_dims = {"1": 10, "2": 10}   # multi-head: two tasks

    params = init_params(k_p, d_in, hidden, out_dims)

    # One-time weight prep (outside the per-call path).
    prepped, meta = prepare_params(params)

    out = normalnn_forward(x, prepped, **meta)
    out = jax.block_until_ready(out)

    ref = _reference_forward(x, params)
    for t in out:
        assert out[t].shape == ref[t].shape, (out[t].shape, ref[t].shape)
        # bf16 operands (f32 accumulation) -> relaxed tolerance vs f32 reference.
        assert jnp.allclose(out[t], ref[t], atol=5e-2, rtol=5e-2), (
            t, float(jnp.max(jnp.abs(out[t] - ref[t]))))

    print("KERNEL_OK")
</pallas_src>

<mosaic_0001>
module attributes {stable_mosaic.version = 11 : i64} {
  func.func @_normalnn_kernel(%arg0: memref<16x1024xbf16, #tpu.memory_space<vmem>>, %arg1: memref<1024x128xbf16, #tpu.memory_space<vmem>>, %arg2: memref<1x128xf32, #tpu.memory_space<vmem>>, %arg3: memref<128x128xbf16, #tpu.memory_space<vmem>>, %arg4: memref<1x128xf32, #tpu.memory_space<vmem>>, %arg5: memref<128x256xbf16, #tpu.memory_space<vmem>>, %arg6: memref<1x256xf32, #tpu.memory_space<vmem>>, %arg7: memref<16x256xf32, #tpu.memory_space<vmem>>) attributes {dimension_semantics = [], scalar_prefetch = 0 : i64, scratch_operands = 0 : i64, tpu.core_type = #tpu.core_type<tc>} {
    %c0 = arith.constant 0 : index
    %c0_0 = arith.constant 0 : index
    %0 = vector.load %arg0[%c0, %c0_0] : memref<16x1024xbf16, #tpu.memory_space<vmem>>, vector<16x1024xbf16>
    %c0_1 = arith.constant 0 : index
    %c0_2 = arith.constant 0 : index
    %1 = vector.load %arg1[%c0_1, %c0_2] : memref<1024x128xbf16, #tpu.memory_space<vmem>>, vector<1024x128xbf16>
    %cst = arith.constant dense<0.000000e+00> : vector<16x128xf32>
    %2 = tpu.matmul %0, %1, %cst {dimension_numbers = #tpu.dot_dimension_numbers<[1], [0], [0], [1], [0, 0, 1, 1], [], []>} : vector<16x1024xbf16>, vector<1024x128xbf16>, vector<16x128xf32> -> vector<16x128xf32>
    %c0_3 = arith.constant 0 : index
    %c0_4 = arith.constant 0 : index
    %3 = vector.load %arg2[%c0_3, %c0_4] : memref<1x128xf32, #tpu.memory_space<vmem>>, vector<1x128xf32>
    %4 = vector.broadcast %3 : vector<1x128xf32> to vector<16x128xf32>
    %5 = arith.addf %2, %4 : vector<16x128xf32>
    %cst_5 = arith.constant 0.000000e+00 : f32
    %6 = vector.broadcast %cst_5 : f32 to vector<16x128xf32>
    %7 = arith.maximumf %5, %6 : vector<16x128xf32>
    %8 = arith.truncf %7 : vector<16x128xf32> to vector<16x128xbf16>
    %c0_6 = arith.constant 0 : index
    %c0_7 = arith.constant 0 : index
    %9 = vector.load %arg3[%c0_6, %c0_7] : memref<128x128xbf16, #tpu.memory_space<vmem>>, vector<128x128xbf16>
    %cst_8 = arith.constant dense<0.000000e+00> : vector<16x128xf32>
    %10 = tpu.matmul %8, %9, %cst_8 {dimension_numbers = #tpu.dot_dimension_numbers<[1], [0], [0], [1], [0, 0, 1, 1], [], []>} : vector<16x128xbf16>, vector<128x128xbf16>, vector<16x128xf32> -> vector<16x128xf32>
    %c0_9 = arith.constant 0 : index
    %c0_10 = arith.constant 0 : index
    %11 = vector.load %arg4[%c0_9, %c0_10] : memref<1x128xf32, #tpu.memory_space<vmem>>, vector<1x128xf32>
    %12 = vector.broadcast %11 : vector<1x128xf32> to vector<16x128xf32>
    %13 = arith.addf %10, %12 : vector<16x128xf32>
    %cst_11 = arith.constant 0.000000e+00 : f32
    %14 = vector.broadcast %cst_11 : f32 to vector<16x128xf32>
    %15 = arith.maximumf %13, %14 : vector<16x128xf32>
    %16 = arith.truncf %15 : vector<16x128xf32> to vector<16x128xbf16>
    %c0_12 = arith.constant 0 : index
    %c0_13 = arith.constant 0 : index
    %17 = vector.load %arg5[%c0_12, %c0_13] : memref<128x256xbf16, #tpu.memory_space<vmem>>, vector<128x256xbf16>
    %cst_14 = arith.constant dense<0.000000e+00> : vector<16x256xf32>
    %18 = tpu.matmul %16, %17, %cst_14 {dimension_numbers = #tpu.dot_dimension_numbers<[1], [0], [0], [1], [0, 0, 1, 1], [], []>} : vector<16x128xbf16>, vector<128x256xbf16>, vector<16x256xf32> -> vector<16x256xf32>
    %c0_15 = arith.constant 0 : index
    %c0_16 = arith.constant 0 : index
    %19 = vector.load %arg6[%c0_15, %c0_16] : memref<1x256xf32, #tpu.memory_space<vmem>>, vector<1x256xf32>
    %20 = vector.broadcast %19 : vector<1x256xf32> to vector<16x256xf32>
    %21 = arith.addf %18, %20 : vector<16x256xf32>
    %c0_17 = arith.constant 0 : index
    %c0_18 = arith.constant 0 : index
    %22 = vector.load %arg7[%c0_17, %c0_18] : memref<16x256xf32, #tpu.memory_space<vmem>>, vector<16x256xf32>
    tpu.vector_store %arg7[%c0_17, %c0_18], %21 {strides = array<i32>} : memref<16x256xf32, #tpu.memory_space<vmem>>, vector<16x256xf32>,
    return
  }
}

</mosaic_0001>

<llo_original>
// kernel: normalnn_forward.1
$region0: #{normalnn_forward.1}
  #allocation0 [shape = 'u32[]', space=smem, size = 0x4, offset = 0x4, fixed_abs, tag = 'smem constant byte address 0x4 - core index']
  #allocation1 [shape = 'u32[144,128]{1,0:T(1,128)}', space=vmem, size = 0x12000, scoped, tag = 'internal scratch']
  %s0 = inlined_call_operand.vmem [shape: bf16[16,1024], index: 0, kind: input, shape index: {}]
  %s1 = inlined_call_operand.hbm [shape: bf16[1024,128], index: 1, kind: input, shape index: {}]
  %s2 = inlined_call_operand.vmem [shape: f32[1,128], index: 2, kind: input, shape index: {}]
  %s3 = inlined_call_operand.vmem [shape: bf16[128,128], index: 3, kind: input, shape index: {}]
  %s4 = inlined_call_operand.vmem [shape: f32[1,128], index: 4, kind: input, shape index: {}]
  %s5 = inlined_call_operand.vmem [shape: bf16[128,256], index: 5, kind: input, shape index: {}]
  %s6 = inlined_call_operand.vmem [shape: f32[1,256], index: 6, kind: input, shape index: {}]
  %s7 = inlined_call_operand.vmem [shape: f32[16,256], index: 7, kind: output, shape index: {}]
  %s8 = sld [smem:[#allocation0]]
  $region42: #{normalnn_forward.1} parent=0
    _
  %s10 = ssub.s32 1, %s8
  %s11 = scalar_select 0, %s10, %s8
  $region1: #{normalnn_forward.1} parent=0
    #allocation2 [shape = 'u8[262144]{0}', space=vmem, size = 0x40000, scoped, tag = 'input window, operand 1, single buffered']
    #allocation3 [shape = 's32[1]{0}', space=sflag, size = 0x4, scoped, tag = 'scoped memory for normalnn_forward.1']
    %12 = vsyncpa [#allocation3], 0
    // Predicated region
    $region2: #{normalnn_forward.1} parent=1 // pred_check
      _
    $region3: #{normalnn_forward.1} parent=1 // pred_check_branch
      %14 = sbr.rel (0) target = $region5
    $region4: #{normalnn_forward.1} parent=1 // pred_region
      _
    $region5: #{normalnn_forward.1} parent=1 // pred_fallthru
      _
    // Predicated region
    $region6: #{normalnn_forward.1} parent=1 // pred_check
      _
    $region7: #{normalnn_forward.1} parent=1 // pred_check_branch
      %16 = sbr.rel (0) target = $region9
    $region8: #{normalnn_forward.1} parent=1 // pred_region
      %s18 = ssub.s32 8192, 8192
      %19 = vsyncadd [#allocation3], %s18
      %s20 = sshll.u32 [#allocation2], 4
      %s21 = int_to_ptr.vmem [resolvable:$true] %s20
      %26 = dma.hbm_to_vmem [thread:$0]  %s1, 8192, %s21, [#allocation3], 64, 64, 4
    $region9: #{normalnn_forward.1} parent=1 // pred_fallthru
      _
    // Predicated region
    $region10: #{normalnn_forward.1} parent=1 // pred_check
      _
    $region11: #{normalnn_forward.1} parent=1 // pred_check_branch
      %28 = sbr.rel (0) target = $region13
    $region12: #{normalnn_forward.1} parent=1 // pred_region
      _
    $region13: #{normalnn_forward.1} parent=1 // pred_fallthru
      _
    // Predicated region
    $region14: #{normalnn_forward.1} parent=1 // pred_check
      _
    $region15: #{normalnn_forward.1} parent=1 // pred_check_branch
      %30 = sbr.rel (0) target = $region17
    $region16: #{normalnn_forward.1} parent=1 // pred_region
      _
    $region17: #{normalnn_forward.1} parent=1 // pred_fallthru
      _
    // Predicated region
    $region18: #{normalnn_forward.1} parent=1 // pred_check
      _
    $region19: #{normalnn_forward.1} parent=1 // pred_check_branch
      %32 = sbr.rel (0) target = $region21
    $region20: #{normalnn_forward.1} parent=1 // pred_region
      _
    $region21: #{normalnn_forward.1} parent=1 // pred_fallthru
      _
    // Predicated region
    $region22: #{normalnn_forward.1} parent=1 // pred_check
      _
    $region23: #{normalnn_forward.1} parent=1 // pred_check_branch
      %34 = sbr.rel (0) target = $region25
    $region24: #{normalnn_forward.1} parent=1 // pred_region
      _
    $region25: #{normalnn_forward.1} parent=1 // pred_fallthru
      _
    // Predicated region
    $region26: #{normalnn_forward.1} parent=1 // pred_check
      _
    $region27: #{normalnn_forward.1} parent=1 // pred_check_branch
      %36 = sbr.rel (0) target = $region29
    $region28: #{normalnn_forward.1} parent=1 // pred_region
      _
    $region29: #{normalnn_forward.1} parent=1 // pred_fallthru
      _
    // Predicated region
    $region30: #{normalnn_forward.1} parent=1 // pred_check
      _
    $region31: #{normalnn_forward.1} parent=1 // pred_check_branch
      %38 = sbr.rel (0) target = $region33
    $region32: #{normalnn_forward.1} parent=1 // pred_region
      %39 = dma.done [#allocation3], 8192
    $region33: #{normalnn_forward.1} parent=1 // pred_fallthru
      _
    %v41 = vld [vmem:[%s0] sm:$0xff]
    %v42 = vld [vmem:[%s0 + $0x8] sm:$0xff]
    %v43 = vld [vmem:[%s0 + $0x10] sm:$0xff]
    %v44 = vld [vmem:[%s0 + $0x18] sm:$0xff]
    %v45 = vld [vmem:[%s0 + $0x20] sm:$0xff]
    %v46 = vld [vmem:[%s0 + $0x28] sm:$0xff]
    %v47 = vld [vmem:[%s0 + $0x30] sm:$0xff]
    %v48 = vld [vmem:[%s0 + $0x38] sm:$0xff]
    %v49 = vld [vmem:[#allocation2] sm:$0xf]
    %v50 = vld [vmem:[#allocation2 + $0x4] sm:$0xf]
    %v51 = vld [vmem:[#allocation2 + $0x8] sm:$0xf]
    %v52 = vld [vmem:[#allocation2 + $0xc] sm:$0xf]
    %v53 = vld [vmem:[#allocation2 + $0x10] sm:$0xf]
    %v54 = vld [vmem:[#allocation2 + $0x14] sm:$0xf]
    %v55 = vld [vmem:[#allocation2 + $0x18] sm:$0xf]
    %v56 = vld [vmem:[#allocation2 + $0x1c] sm:$0xf]
    %v57 = vld [vmem:[#allocation2 + $0x20] sm:$0xf]
    %v58 = vld [vmem:[#allocation2 + $0x24] sm:$0xf]
    %v59 = vld [vmem:[#allocation2 + $0x28] sm:$0xf]
    %v60 = vld [vmem:[#allocation2 + $0x2c] sm:$0xf]
    %v61 = vld [vmem:[#allocation2 + $0x30] sm:$0xf]
    %v62 = vld [vmem:[#allocation2 + $0x34] sm:$0xf]
    %v63 = vld [vmem:[#allocation2 + $0x38] sm:$0xf]
    %v64 = vld [vmem:[#allocation2 + $0x3c] sm:$0xf]
    %v65 = vld [vmem:[#allocation2 + $0x40] sm:$0xf]
    %v66 = vld [vmem:[#allocation2 + $0x44] sm:$0xf]
    %v67 = vld [vmem:[#allocation2 + $0x48] sm:$0xf]
    %v68 = vld [vmem:[#allocation2 + $0x4c] sm:$0xf]
    %v69 = vld [vmem:[#allocation2 + $0x50] sm:$0xf]
    %v70 = vld [vmem:[#allocation2 + $0x54] sm:$0xf]
    %v71 = vld [vmem:[#allocation2 + $0x58] sm:$0xf]
    %v72 = vld [vmem:[#allocation2 + $0x5c] sm:$0xf]
    %v73 = vld [vmem:[#allocation2 + $0x60] sm:$0xf]
    %v74 = vld [vmem:[#allocation2 + $0x64] sm:$0xf]
    %v75 = vld [vmem:[#allocation2 + $0x68] sm:$0xf]
    %v76 = vld [vmem:[#allocation2 + $0x6c] sm:$0xf]
    %v77 = vld [vmem:[#allocation2 + $0x70] sm:$0xf]
    %v78 = vld [vmem:[#allocation2 + $0x74] sm:$0xf]
    %v79 = vld [vmem:[#allocation2 + $0x78] sm:$0xf]
    %v80 = vld [vmem:[#allocation2 + $0x7c] sm:$0xf]
    %v81 = vld [vmem:[#allocation2 + $0x80] sm:$0xf]
    %v82 = vld [vmem:[#allocation2 + $0x84] sm:$0xf]
    %v83 = vld [vmem:[#allocation2 + $0x88] sm:$0xf]
    %v84 = vld [vmem:[#allocation2 + $0x8c] sm:$0xf]
    %v85 = vld [vmem:[#allocation2 + $0x90] sm:$0xf]
    %v86 = vld [vmem:[#allocation2 + $0x94] sm:$0xf]
    %v87 = vld [vmem:[#allocation2 + $0x98] sm:$0xf]
    %v88 = vld [vmem:[#allocation2 + $0x9c] sm:$0xf]
    %v89 = vld [vmem:[#allocation2 + $0xa0] sm:$0xf]
    %v90 = vld [vmem:[#allocation2 + $0xa4] sm:$0xf]
    %v91 = vld [vmem:[#allocation2 + $0xa8] sm:$0xf]
    %v92 = vld [vmem:[#allocation2 + $0xac] sm:$0xf]
    %v93 = vld [vmem:[#allocation2 + $0xb0] sm:$0xf]
    %v94 = vld [vmem:[#allocation2 + $0xb4] sm:$0xf]
    %v95 = vld [vmem:[#allocation2 + $0xb8] sm:$0xf]
    %v96 = vld [vmem:[#allocation2 + $0xbc] sm:$0xf]
    %v97 = vld [vmem:[#allocation2 + $0xc0] sm:$0xf]
    %v98 = vld [vmem:[#allocation2 + $0xc4] sm:$0xf]
    %v99 = vld [vmem:[#allocation2 + $0xc8] sm:$0xf]
    %v100 = vld [vmem:[#allocation2 + $0xcc] sm:$0xf]
    %v101 = vld [vmem:[#allocation2 + $0xd0] sm:$0xf]
    %v102 = vld [vmem:[#allocation2 + $0xd4] sm:$0xf]
    %v103 = vld [vmem:[#allocation2 + $0xd8] sm:$0xf]
    %v104 = vld [vmem:[#allocation2 + $0xdc] sm:$0xf]
    %v105 = vld [vmem:[#allocation2 + $0xe0] sm:$0xf]
    %v106 = vld [vmem:[#allocation2 + $0xe4] sm:$0xf]
    %v107 = vld [vmem:[#allocation2 + $0xe8] sm:$0xf]
    %v108 = vld [vmem:[#allocation2 + $0xec] sm:$0xf]
    %v109 = vld [vmem:[#allocation2 + $0xf0] sm:$0xf]
    %v110 = vld [vmem:[#allocation2 + $0xf4] sm:$0xf]
    %v111 = vld [vmem:[#allocation2 + $0xf8] sm:$0xf]
    %v112 = vld [vmem:[#allocation2 + $0xfc] sm:$0xf]
    %v113 = vld [vmem:[#allocation2 + $0x100] sm:$0xf]
    %v114 = vld [vmem:[#allocation2 + $0x104] sm:$0xf]
    %v115 = vld [vmem:[#allocation2 + $0x108] sm:$0xf]
    %v116 = vld [vmem:[#allocation2 + $0x10c] sm:$0xf]
    %v117 = vld [vmem:[#allocation2 + $0x110] sm:$0xf]
    %v118 = vld [vmem:[#allocation2 + $0x114] sm:$0xf]
    %v119 = vld [vmem:[#allocation2 + $0x118] sm:$0xf]
    %v120 = vld [vmem:[#allocation2 + $0x11c] sm:$0xf]
    %v121 = vld [vmem:[#allocation2 + $0x120] sm:$0xf]
    %v122 = vld [vmem:[#allocation2 + $0x124] sm:$0xf]
    %v123 = vld [vmem:[#allocation2 + $0x128] sm:$0xf]
    %v124 = vld [vmem:[#allocation2 + $0x12c] sm:$0xf]
    %v125 = vld [vmem:[#allocation2 + $0x130] sm:$0xf]
    %v126 = vld [vmem:[#allocation2 + $0x134] sm:$0xf]
    %v127 = vld [vmem:[#allocation2 + $0x138] sm:$0xf]
    %v128 = vld [vmem:[#allocation2 + $0x13c] sm:$0xf]
    %v129 = vld [vmem:[#allocation2 + $0x140] sm:$0xf]
    %v130 = vld [vmem:[#allocation2 + $0x144] sm:$0xf]
    %v131 = vld [vmem:[#allocation2 + $0x148] sm:$0xf]
    %v132 = vld [vmem:[#allocation2 + $0x14c] sm:$0xf]
    %v133 = vld [vmem:[#allocation2 + $0x150] sm:$0xf]
    %v134 = vld [vmem:[#allocation2 + $0x154] sm:$0xf]
    %v135 = vld [vmem:[#allocation2 + $0x158] sm:$0xf]
    %v136 = vld [vmem:[#allocation2 + $0x15c] sm:$0xf]
    %v137 = vld [vmem:[#allocation2 + $0x160] sm:$0xf]
    %v138 = vld [vmem:[#allocation2 + $0x164] sm:$0xf]
    %v139 = vld [vmem:[#allocation2 + $0x168] sm:$0xf]
    %v140 = vld [vmem:[#allocation2 + $0x16c] sm:$0xf]
    %v141 = vld [vmem:[#allocation2 + $0x170] sm:$0xf]
    %v142 = vld [vmem:[#allocation2 + $0x174] sm:$0xf]
    %v143 = vld [vmem:[#allocation2 + $0x178] sm:$0xf]
    %v144 = vld [vmem:[#allocation2 + $0x17c] sm:$0xf]
    %v145 = vld [vmem:[#allocation2 + $0x180] sm:$0xf]
    %v146 = vld [vmem:[#allocation2 + $0x184] sm:$0xf]
    %v147 = vld [vmem:[#allocation2 + $0x188] sm:$0xf]
    %v148 = vld [vmem:[#allocation2 + $0x18c] sm:$0xf]
    %v149 = vld [vmem:[#allocation2 + $0x190] sm:$0xf]
    %v150 = vld [vmem:[#allocation2 + $0x194] sm:$0xf]
    %v151 = vld [vmem:[#allocation2 + $0x198] sm:$0xf]
    %v152 = vld [vmem:[#allocation2 + $0x19c] sm:$0xf]
    %v153 = vld [vmem:[#allocation2 + $0x1a0] sm:$0xf]
    %v154 = vld [vmem:[#allocation2 + $0x1a4] sm:$0xf]
    %v155 = vld [vmem:[#allocation2 + $0x1a8] sm:$0xf]
    %v156 = vld [vmem:[#allocation2 + $0x1ac] sm:$0xf]
    %v157 = vld [vmem:[#allocation2 + $0x1b0] sm:$0xf]
    %v158 = vld [vmem:[#allocation2 + $0x1b4] sm:$0xf]
    %v159 = vld [vmem:[#allocation2 + $0x1b8] sm:$0xf]
    %v160 = vld [vmem:[#allocation2 + $0x1bc] sm:$0xf]
    %v161 = vld [vmem:[#allocation2 + $0x1c0] sm:$0xf]
    %v162 = vld [vmem:[#allocation2 + $0x1c4] sm:$0xf]
    %v163 = vld [vmem:[#allocation2 + $0x1c8] sm:$0xf]
    %v164 = vld [vmem:[#allocation2 + $0x1cc] sm:$0xf]
    %v165 = vld [vmem:[#allocation2 + $0x1d0] sm:$0xf]
    %v166 = vld [vmem:[#allocation2 + $0x1d4] sm:$0xf]
    %v167 = vld [vmem:[#allocation2 + $0x1d8] sm:$0xf]
    %v168 = vld [vmem:[#allocation2 + $0x1dc] sm:$0xf]
    %v169 = vld [vmem:[#allocation2 + $0x1e0] sm:$0xf]
    %v170 = vld [vmem:[#allocation2 + $0x1e4] sm:$0xf]
    %v171 = vld [vmem:[#allocation2 + $0x1e8] sm:$0xf]
    %v172 = vld [vmem:[#allocation2 + $0x1ec] sm:$0xf]
    %v173 = vld [vmem:[#allocation2 + $0x1f0] sm:$0xf]
    %v174 = vld [vmem:[#allocation2 + $0x1f4] sm:$0xf]
    %v175 = vld [vmem:[#allocation2 + $0x1f8] sm:$0xf]
    %v176 = vld [vmem:[#allocation2 + $0x1fc] sm:$0xf]
    %v177 = vld [vmem:[%s2] sm:$0x1]
    %v179 = vlaneseq
    %v180 = vshrl.u32 %v179, 7
    %v181 = vsub.s32 0, %v180
    %v182 = vrot.slane %v177, %v181
    %v192 = vunpack.c.l.b16 %v41
    %v193 = vunpack.c.h.b16 %v41
    %v194 = vunpack.c.l.b16 %v42
    %v195 = vunpack.c.h.b16 %v42
    %v196 = vunpack.c.l.b16 %v43
    %v197 = vunpack.c.h.b16 %v43
    %v198 = vunpack.c.l.b16 %v44
    %v199 = vunpack.c.h.b16 %v44
    %v200 = vunpack.c.l.b16 %v45
    %v201 = vunpack.c.h.b16 %v45
    %v202 = vunpack.c.l.b16 %v46
    %v203 = vunpack.c.h.b16 %v46
    %v204 = vunpack.c.l.b16 %v47
    %v205 = vunpack.c.h.b16 %v47
    %v206 = vunpack.c.l.b16 %v48
    %v207 = vunpack.c.h.b16 %v48
    %v208 = vpack.c.b16 %v200, %v192
    %v209 = vpack.c.b16 %v201, %v193
    %v210 = vpack.c.b16 %v202, %v194
    %v211 = vpack.c.b16 %v203, %v195
    %v212 = vpack.c.b16 %v204, %v196
    %v213 = vpack.c.b16 %v205, %v197
    %v214 = vpack.c.b16 %v206, %v198
    %v215 = vpack.c.b16 %v207, %v199
    %v352 = vunpack.c.l.b16 %v49
    %v353 = vunpack.c.l.b16 %v50
    %v354 = vunpack.c.l.b16 %v51
    %v355 = vunpack.c.l.b16 %v52
    %v356 = vunpack.c.l.b16 %v53
    %v357 = vunpack.c.l.b16 %v54
    %v358 = vunpack.c.l.b16 %v55
    %v359 = vunpack.c.l.b16 %v56
    %v360 = vunpack.c.l.b16 %v57
    %v361 = vunpack.c.l.b16 %v58
    %v362 = vunpack.c.l.b16 %v59
    %v363 = vunpack.c.l.b16 %v60
    %v364 = vunpack.c.l.b16 %v61
    %v365 = vunpack.c.l.b16 %v62
    %v366 = vunpack.c.l.b16 %v63
    %v367 = vunpack.c.l.b16 %v64
    %v368 = vunpack.c.l.b16 %v65
    %v369 = vunpack.c.l.b16 %v66
    %v370 = vunpack.c.l.b16 %v67
    %v371 = vunpack.c.l.b16 %v68
    %v372 = vunpack.c.l.b16 %v69
    %v373 = vunpack.c.l.b16 %v70
    %v374 = vunpack.c.l.b16 %v71
    %v375 = vunpack.c.l.b16 %v72
    %v376 = vunpack.c.l.b16 %v73
    %v377 = vunpack.c.l.b16 %v74
    %v378 = vunpack.c.l.b16 %v75
    %v379 = vunpack.c.l.b16 %v76
    %v380 = vunpack.c.l.b16 %v77
    %v381 = vunpack.c.l.b16 %v78
    %v382 = vunpack.c.l.b16 %v79
    %v383 = vunpack.c.l.b16 %v80
    %v384 = vunpack.c.l.b16 %v81
    %v385 = vunpack.c.l.b16 %v82
    %v386 = vunpack.c.l.b16 %v83
    %v387 = vunpack.c.l.b16 %v84
    %v388 = vunpack.c.l.b16 %v85
    %v389 = vunpack.c.l.b16 %v86
    %v390 = vunpack.c.l.b16 %v87
    %v391 = vunpack.c.l.b16 %v88
    %v392 = vunpack.c.l.b16 %v89
    %v393 = vunpack.c.l.b16 %v90
    %v394 = vunpack.c.l.b16 %v91
    %v395 = vunpack.c.l.b16 %v92
    %v396 = vunpack.c.l.b16 %v93
    %v397 = vunpack.c.l.b16 %v94
    %v398 = vunpack.c.l.b16 %v95
    %v399 = vunpack.c.l.b16 %v96
    %v400 = vunpack.c.l.b16 %v97
    %v401 = vunpack.c.l.b16 %v98
    %v402 = vunpack.c.l.b16 %v99
    %v403 = vunpack.c.l.b16 %v100
    %v404 = vunpack.c.l.b16 %v101
    %v405 = vunpack.c.l.b16 %v102
    %v406 = vunpack.c.l.b16 %v103
    %v407 = vunpack.c.l.b16 %v104
    %v408 = vunpack.c.l.b16 %v105
    %v409 = vunpack.c.l.b16 %v106
    %v410 = vunpack.c.l.b16 %v107
    %v411 = vunpack.c.l.b16 %v108
    %v412 = vunpack.c.l.b16 %v109
    %v413 = vunpack.c.l.b16 %v110
    %v414 = vunpack.c.l.b16 %v111
    %v415 = vunpack.c.l.b16 %v112
    %v416 = vunpack.c.l.b16 %v113
    %v417 = vunpack.c.l.b16 %v114
    %v418 = vunpack.c.l.b16 %v115
    %v419 = vunpack.c.l.b16 %v116
    %v420 = vunpack.c.l.b16 %v117
    %v421 = vunpack.c.l.b16 %v118
    %v422 = vunpack.c.l.b16 %v119
    %v423 = vunpack.c.l.b16 %v120
    %v424 = vunpack.c.l.b16 %v121
    %v425 = vunpack.c.l.b16 %v122
    %v426 = vunpack.c.l.b16 %v123
    %v427 = vunpack.c.l.b16 %v124
    %v428 = vunpack.c.l.b16 %v125
    %v429 = vunpack.c.l.b16 %v126
    %v430 = vunpack.c.l.b16 %v127
    %v431 = vunpack.c.l.b16 %v128
    %v432 = vunpack.c.l.b16 %v129
    %v433 = vunpack.c.l.b16 %v130
    %v434 = vunpack.c.l.b16 %v131
    %v435 = vunpack.c.l.b16 %v132
    %v436 = vunpack.c.l.b16 %v133
    %v437 = vunpack.c.l.b16 %v134
    %v438 = vunpack.c.l.b16 %v135
    %v439 = vunpack.c.l.b16 %v136
    %v440 = vunpack.c.l.b16 %v137
    %v441 = vunpack.c.l.b16 %v138
    %v442 = vunpack.c.l.b16 %v139
    %v443 = vunpack.c.l.b16 %v140
    %v444 = vunpack.c.l.b16 %v141
    %v445 = vunpack.c.l.b16 %v142
    %v446 = vunpack.c.l.b16 %v143
    %v447 = vunpack.c.l.b16 %v144
    %v448 = vunpack.c.l.b16 %v145
    %v449 = vunpack.c.l.b16 %v146
    %v450 = vunpack.c.l.b16 %v147
    %v451 = vunpack.c.l.b16 %v148
    %v452 = vunpack.c.l.b16 %v149
    %v453 = vunpack.c.l.b16 %v150
    %v454 = vunpack.c.l.b16 %v151
    %v455 = vunpack.c.l.b16 %v152
    %v456 = vunpack.c.l.b16 %v153
    %v457 = vunpack.c.l.b16 %v154
    %v458 = vunpack.c.l.b16 %v155
    %v459 = vunpack.c.l.b16 %v156
    %v460 = vunpack.c.l.b16 %v157
    %v461 = vunpack.c.l.b16 %v158
    %v462 = vunpack.c.l.b16 %v159
    %v463 = vunpack.c.l.b16 %v160
    %v464 = vunpack.c.l.b16 %v161
    %v465 = vunpack.c.l.b16 %v162
    %v466 = vunpack.c.l.b16 %v163
    %v467 = vunpack.c.l.b16 %v164
    %v468 = vunpack.c.l.b16 %v165
    %v469 = vunpack.c.l.b16 %v166
    %v470 = vunpack.c.l.b16 %v167
    %v471 = vunpack.c.l.b16 %v168
    %v472 = vunpack.c.l.b16 %v169
    %v473 = vunpack.c.l.b16 %v170
    %v474 = vunpack.c.l.b16 %v171
    %v475 = vunpack.c.l.b16 %v172
    %v476 = vunpack.c.l.b16 %v173
    %v477 = vunpack.c.l.b16 %v174
    %v478 = vunpack.c.l.b16 %v175
    %v479 = vunpack.c.l.b16 %v176
    %v480 = vpack.c.b16 %v353, %v352
    %v481 = vpack.c.b16 %v355, %v354
    %v482 = vpack.c.b16 %v357, %v356
    %v483 = vpack.c.b16 %v359, %v358
    %v484 = vpack.c.b16 %v361, %v360
    %v485 = vpack.c.b16 %v363, %v362
    %v486 = vpack.c.b16 %v365, %v364
    %v487 = vpack.c.b16 %v367, %v366
    %v488 = vpack.c.b16 %v369, %v368
    %v489 = vpack.c.b16 %v371, %v370
    %v490 = vpack.c.b16 %v373, %v372
    %v491 = vpack.c.b16 %v375, %v374
    %v492 = vpack.c.b16 %v377, %v376
    %v493 = vpack.c.b16 %v379, %v378
    %v494 = vpack.c.b16 %v381, %v380
    %v495 = vpack.c.b16 %v383, %v382
    %v496 = vpack.c.b16 %v385, %v384
    %v497 = vpack.c.b16 %v387, %v386
    %v498 = vpack.c.b16 %v389, %v388
    %v499 = vpack.c.b16 %v391, %v390
    %v500 = vpack.c.b16 %v393, %v392
    %v501 = vpack.c.b16 %v395, %v394
    %v502 = vpack.c.b16 %v397, %v396
    %v503 = vpack.c.b16 %v399, %v398
    %v504 = vpack.c.b16 %v401, %v400
    %v505 = vpack.c.b16 %v403, %v402
    %v506 = vpack.c.b16 %v405, %v404
    %v507 = vpack.c.b16 %v407, %v406
    %v508 = vpack.c.b16 %v409, %v408
    %v509 = vpack.c.b16 %v411, %v410
    %v510 = vpack.c.b16 %v413, %v412
    %v511 = vpack.c.b16 %v415, %v414
    %v512 = vpack.c.b16 %v417, %v416
    %v513 = vpack.c.b16 %v419, %v418
    %v514 = vpack.c.b16 %v421, %v420
    %v515 = vpack.c.b16 %v423, %v422
    %v516 = vpack.c.b16 %v425, %v424
    %v517 = vpack.c.b16 %v427, %v426
    %v518 = vpack.c.b16 %v429, %v428
    %v519 = vpack.c.b16 %v431, %v430
    %v520 = vpack.c.b16 %v433, %v432
    %v521 = vpack.c.b16 %v435, %v434
    %v522 = vpack.c.b16 %v437, %v436
    %v523 = vpack.c.b16 %v439, %v438
    %v524 = vpack.c.b16 %v441, %v440
    %v525 = vpack.c.b16 %v443, %v442
    %v526 = vpack.c.b16 %v445, %v444
    %v527 = vpack.c.b16 %v447, %v446
    %v528 = vpack.c.b16 %v449, %v448
    %v529 = vpack.c.b16 %v451, %v450
    %v530 = vpack.c.b16 %v453, %v452
    %v531 = vpack.c.b16 %v455, %v454
    %v532 = vpack.c.b16 %v457, %v456
    %v533 = vpack.c.b16 %v459, %v458
    %v534 = vpack.c.b16 %v461, %v460
    %v535 = vpack.c.b16 %v463, %v462
    %v536 = vpack.c.b16 %v465, %v464
    %v537 = vpack.c.b16 %v467, %v466
    %v538 = vpack.c.b16 %v469, %v468
    %v539 = vpack.c.b16 %v471, %v470
    %v540 = vpack.c.b16 %v473, %v472
    %v541 = vpack.c.b16 %v475, %v474
    %v542 = vpack.c.b16 %v477, %v476
    %v543 = vpack.c.b16 %v479, %v478
    %608 = vmatprep.subr.bf16.mxu0 0
    %609 = vmatpush1.bf16.msra.mxu0 %v480
    %610 = vmatprep.subr.bf16.mxu0 0
    %611 = vmatpush1.bf16.msra.mxu0 %v481
    %612 = vmatprep.subr.bf16.mxu0 0
    %613 = vmatpush1.bf16.msra.mxu0 %v482
    %614 = vmatprep.subr.bf16.mxu0 0
    %615 = vmatpush1.bf16.msra.mxu0 %v483
    %616 = vmatprep.subr.bf16.mxu0 0
    %617 = vmatpush1.bf16.msra.mxu0 %v484
    %618 = vmatprep.subr.bf16.mxu0 0
    %619 = vmatpush1.bf16.msra.mxu0 %v485
    %620 = vmatprep.subr.bf16.mxu0 0
    %621 = vmatpush1.bf16.msra.mxu0 %v486
    %622 = vmatprep.subr.bf16.mxu0 0
    %623 = vmatpush1.bf16.msra.mxu0 %v487
    %624 = vmatprep.subr.bf16.mxu0 0
    %625 = vmatpush1.bf16.msra.mxu0 %v488
    %626 = vmatprep.subr.bf16.mxu0 0
    %627 = vmatpush1.bf16.msra.mxu0 %v489
    %628 = vmatprep.subr.bf16.mxu0 0
    %629 = vmatpush1.bf16.msra.mxu0 %v490
    %630 = vmatprep.subr.bf16.mxu0 0
    %631 = vmatpush1.bf16.msra.mxu0 %v491
    %632 = vmatprep.subr.bf16.mxu0 0
    %633 = vmatpush1.bf16.msra.mxu0 %v492
    %634 = vmatprep.subr.bf16.mxu0 0
    %635 = vmatpush1.bf16.msra.mxu0 %v493
    %636 = vmatprep.subr.bf16.mxu0 0
    %637 = vmatpush1.bf16.msra.mxu0 %v494
    %638 = vmatprep.subr.bf16.mxu0 0
    %639 = vmatpush1.bf16.msra.mxu0 %v495
    %640 = vmatprep.mubr.bf16.mxu0 %v209
    %641 = vmatmul.mubr.bf16.gmra.mrb[0].mxu0 %v208
    %v642 = vpop.f32.mrb[0].mxu0
    %v643 = vadd.f32 %v182, %v642
    %v644 = vpop.f32.mrb[0].mxu0
    %v645 = vpop.f32.mrb[0].mxu0
    %v646 = vadd.f32 %v182, %v645
    %v647 = vpop.f32.mrb[0].mxu0
    %648 = vdwg.mxu0
    %649 = vmatprep.subr.bf16.mxu0 0
    %650 = vmatpush1.bf16.msra.mxu0 %v496
    %651 = vmatprep.subr.bf16.mxu0 0
    %652 = vmatpush1.bf16.msra.mxu0 %v497
    %653 = vmatprep.subr.bf16.mxu0 0
    %654 = vmatpush1.bf16.msra.mxu0 %v498
    %655 = vmatprep.subr.bf16.mxu0 0
    %656 = vmatpush1.bf16.msra.mxu0 %v499
    %657 = vmatprep.subr.bf16.mxu0 0
    %658 = vmatpush1.bf16.msra.mxu0 %v500
    %659 = vmatprep.subr.bf16.mxu0 0
    %660 = vmatpush1.bf16.msra.mxu0 %v501
    %661 = vmatprep.subr.bf16.mxu0 0
    %662 = vmatpush1.bf16.msra.mxu0 %v502
    %663 = vmatprep.subr.bf16.mxu0 0
    %664 = vmatpush1.bf16.msra.mxu0 %v503
    %665 = vmatprep.subr.bf16.mxu0 0
    %666 = vmatpush1.bf16.msra.mxu0 %v504
    %667 = vmatprep.subr.bf16.mxu0 0
    %668 = vmatpush1.bf16.msra.mxu0 %v505
    %669 = vmatprep.subr.bf16.mxu0 0
    %670 = vmatpush1.bf16.msra.mxu0 %v506
    %671 = vmatprep.subr.bf16.mxu0 0
    %672 = vmatpush1.bf16.msra.mxu0 %v507
    %673 = vmatprep.subr.bf16.mxu0 0
    %674 = vmatpush1.bf16.msra.mxu0 %v508
    %675 = vmatprep.subr.bf16.mxu0 0
    %676 = vmatpush1.bf16.msra.mxu0 %v509
    %677 = vmatprep.subr.bf16.mxu0 0
    %678 = vmatpush1.bf16.msra.mxu0 %v510
    %679 = vmatprep.subr.bf16.mxu0 0
    %680 = vmatpush1.bf16.msra.mxu0 %v511
    %681 = vmatprep.mubr.bf16.mxu0 %v211
    %682 = vmatmul.mubr.bf16.gmra.mrb[0].mxu0 %v210
    %v683 = vpop.f32.mrb[0].mxu0
    %v684 = vadd.f32 %v643, %v683
    %v685 = vpop.f32.mrb[0].mxu0
    %v686 = vpop.f32.mrb[0].mxu0
    %v687 = vadd.f32 %v646, %v686
    %v688 = vpop.f32.mrb[0].mxu0
    %689 = vdwg.mxu0
    %690 = vmatprep.subr.bf16.mxu0 0
    %691 = vmatpush1.bf16.msra.mxu0 %v512
    %692 = vmatprep.subr.bf16.mxu0 0
    %693 = vmatpush1.bf16.msra.mxu0 %v513
    %694 = vmatprep.subr.bf16.mxu0 0
    %695 = vmatpush1.bf16.msra.mxu0 %v514
    %696 = vmatprep.subr.bf16.mxu0 0
    %697 = vmatpush1.bf16.msra.mxu0 %v515
    %698 = vmatprep.subr.bf16.mxu0 0
    %699 = vmatpush1.bf16.msra.mxu0 %v516
    %700 = vmatprep.subr.bf16.mxu0 0
    %701 = vmatpush1.bf16.msra.mxu0 %v517
    %702 = vmatprep.subr.bf16.mxu0 0
    %703 = vmatpush1.bf16.msra.mxu0 %v518
    %704 = vmatprep.subr.bf16.mxu0 0
    %705 = vmatpush1.bf16.msra.mxu0 %v519
    %706 = vmatprep.subr.bf16.mxu0 0
    %707 = vmatpush1.bf16.msra.mxu0 %v520
    %708 = vmatprep.subr.bf16.mxu0 0
    %709 = vmatpush1.bf16.msra.mxu0 %v521
    %710 = vmatprep.subr.bf16.mxu0 0
    %711 = vmatpush1.bf16.msra.mxu0 %v522
    %712 = vmatprep.subr.bf16.mxu0 0
    %713 = vmatpush1.bf16.msra.mxu0 %v523
    %714 = vmatprep.subr.bf16.mxu0 0
    %715 = vmatpush1.bf16.msra.mxu0 %v524
    %716 = vmatprep.subr.bf16.mxu0 0
    %717 = vmatpush1.bf16.msra.mxu0 %v525
    %718 = vmatprep.subr.bf16.mxu0 0
    %719 = vmatpush1.bf16.msra.mxu0 %v526
    %720 = vmatprep.subr.bf16.mxu0 0
    %721 = vmatpush1.bf16.msra.mxu0 %v527
    %722 = vmatprep.mubr.bf16.mxu0 %v213
    %723 = vmatmul.mubr.bf16.gmra.mrb[0].mxu0 %v212
    %v724 = vpop.f32.mrb[0].mxu0
    %v725 = vadd.f32 %v684, %v724
    %v726 = vpop.f32.mrb[0].mxu0
    %v727 = vpop.f32.mrb[0].mxu0
    %v728 = vadd.f32 %v687, %v727
    %v729 = vpop.f32.mrb[0].mxu0
    %730 = vdwg.mxu0
    %731 = vmatprep.subr.bf16.mxu0 0
    %732 = vmatpush1.bf16.msra.mxu0 %v528
    %733 = vmatprep.subr.bf16.mxu0 0
    %734 = vmatpush1.bf16.msra.mxu0 %v529
    %735 = vmatprep.subr.bf16.mxu0 0
    %736 = vmatpush1.bf16.msra.mxu0 %v530
    %737 = vmatprep.subr.bf16.mxu0 0
    %738 = vmatpush1.bf16.msra.mxu0 %v531
    %739 = vmatprep.subr.bf16.mxu0 0
    %740 = vmatpush1.bf16.msra.mxu0 %v532
    %741 = vmatprep.subr.bf16.mxu0 0
    %742 = vmatpush1.bf16.msra.mxu0 %v533
    %743 = vmatprep.subr.bf16.mxu0 0
    %744 = vmatpush1.bf16.msra.mxu0 %v534
    %745 = vmatprep.subr.bf16.mxu0 0
    %746 = vmatpush1.bf16.msra.mxu0 %v535
    %747 = vmatprep.subr.bf16.mxu0 0
    %748 = vmatpush1.bf16.msra.mxu0 %v536
    %749 = vmatprep.subr.bf16.mxu0 0
    %750 = vmatpush1.bf16.msra.mxu0 %v537
    %751 = vmatprep.subr.bf16.mxu0 0
    %752 = vmatpush1.bf16.msra.mxu0 %v538
    %753 = vmatprep.subr.bf16.mxu0 0
    %754 = vmatpush1.bf16.msra.mxu0 %v539
    %755 = vmatprep.subr.bf16.mxu0 0
    %756 = vmatpush1.bf16.msra.mxu0 %v540
    %757 = vmatprep.subr.bf16.mxu0 0
    %758 = vmatpush1.bf16.msra.mxu0 %v541
    %759 = vmatprep.subr.bf16.mxu0 0
    %760 = vmatpush1.bf16.msra.mxu0 %v542
    %761 = vmatprep.subr.bf16.mxu0 0
    %762 = vmatpush1.bf16.msra.mxu0 %v543
    %763 = vmatprep.mubr.bf16.mxu0 %v215
    %764 = vmatmul.mubr.bf16.gmra.mrb[0].mxu0 %v214
    %v765 = vpop.f32.mrb[0].mxu0
    %v766 = vadd.f32 %v725, %v765
    %v767 = vpop.f32.mrb[0].mxu0
    %v768 = vpop.f32.mrb[0].mxu0
    %v769 = vadd.f32 %v728, %v768
    %v770 = vpop.f32.mrb[0].mxu0
    %771 = vdwg.mxu0
    %v772 = vmax.f32 %v766, 0.0
    %v773 = vmax.f32 %v769, 0.0
    %v774 = vpack.c.bf16 %v773, %v772
    %v775 = vld [vmem:[%s3] sm:$0xf]
    %v776 = vld [vmem:[%s3 + $0x4] sm:$0xf]
    %v777 = vld [vmem:[%s3 + $0x8] sm:$0xf]
    %v778 = vld [vmem:[%s3 + $0xc] sm:$0xf]
    %v779 = vld [vmem:[%s3 + $0x10] sm:$0xf]
    %v780 = vld [vmem:[%s3 + $0x14] sm:$0xf]
    %v781 = vld [vmem:[%s3 + $0x18] sm:$0xf]
    %v782 = vld [vmem:[%s3 + $0x1c] sm:$0xf]
    %v783 = vld [vmem:[%s3 + $0x20] sm:$0xf]
    %v784 = vld [vmem:[%s3 + $0x24] sm:$0xf]
    %v785 = vld [vmem:[%s3 + $0x28] sm:$0xf]
    %v786 = vld [vmem:[%s3 + $0x2c] sm:$0xf]
    %v787 = vld [vmem:[%s3 + $0x30] sm:$0xf]
    %v788 = vld [vmem:[%s3 + $0x34] sm:$0xf]
    %v789 = vld [vmem:[%s3 + $0x38] sm:$0xf]
    %v790 = vld [vmem:[%s3 + $0x3c] sm:$0xf]
    %v791 = vld [vmem:[%s4] sm:$0x1]
    %v793 = vlaneseq
    %v794 = vshrl.u32 %v793, 7
    %v795 = vsub.s32 0, %v794
    %v796 = vrot.slane %v791, %v795
    %v814 = vunpack.c.l.b16 %v775
    %v815 = vunpack.c.l.b16 %v776
    %v816 = vunpack.c.l.b16 %v777
    %v817 = vunpack.c.l.b16 %v778
    %v818 = vunpack.c.l.b16 %v779
    %v819 = vunpack.c.l.b16 %v780
    %v820 = vunpack.c.l.b16 %v781
    %v821 = vunpack.c.l.b16 %v782
    %v822 = vunpack.c.l.b16 %v783
    %v823 = vunpack.c.l.b16 %v784
    %v824 = vunpack.c.l.b16 %v785
    %v825 = vunpack.c.l.b16 %v786
    %v826 = vunpack.c.l.b16 %v787
    %v827 = vunpack.c.l.b16 %v788
    %v828 = vunpack.c.l.b16 %v789
    %v829 = vunpack.c.l.b16 %v790
    %v830 = vpack.c.b16 %v815, %v814
    %v831 = vpack.c.b16 %v817, %v816
    %v832 = vpack.c.b16 %v819, %v818
    %v833 = vpack.c.b16 %v821, %v820
    %v834 = vpack.c.b16 %v823, %v822
    %v835 = vpack.c.b16 %v825, %v824
    %v836 = vpack.c.b16 %v827, %v826
    %v837 = vpack.c.b16 %v829, %v828
    %846 = vmatprep.subr.bf16.mxu0 0
    %847 = vmatpush1.bf16.msra.mxu0 %v830
    %848 = vmatprep.subr.bf16.mxu0 0
    %849 = vmatpush1.bf16.msra.mxu0 %v831
    %850 = vmatprep.subr.bf16.mxu0 0
    %851 = vmatpush1.bf16.msra.mxu0 %v832
    %852 = vmatprep.subr.bf16.mxu0 0
    %853 = vmatpush1.bf16.msra.mxu0 %v833
    %854 = vmatprep.subr.bf16.mxu0 0
    %855 = vmatpush1.bf16.msra.mxu0 %v834
    %856 = vmatprep.subr.bf16.mxu0 0
    %857 = vmatpush1.bf16.msra.mxu0 %v835
    %858 = vmatprep.subr.bf16.mxu0 0
    %859 = vmatpush1.bf16.msra.mxu0 %v836
    %860 = vmatprep.subr.bf16.mxu0 0
    %861 = vmatpush1.bf16.msra.mxu0 %v837
    %862 = vmatprep.subr.bf16.mxu0 0
    %863 = vmatpush1.bf16.msra.mxu0 0
    %864 = vmatprep.subr.bf16.mxu0 0
    %865 = vmatpush1.bf16.msra.mxu0 0
    %866 = vmatprep.subr.bf16.mxu0 0
    %867 = vmatpush1.bf16.msra.mxu0 0
    %868 = vmatprep.subr.bf16.mxu0 0
    %869 = vmatpush1.bf16.msra.mxu0 0
    %870 = vmatprep.subr.bf16.mxu0 0
    %871 = vmatpush1.bf16.msra.mxu0 0
    %872 = vmatprep.subr.bf16.mxu0 0
    %873 = vmatpush1.bf16.msra.mxu0 0
    %874 = vmatprep.subr.bf16.mxu0 0
    %875 = vmatpush1.bf16.msra.mxu0 0
    %876 = vmatprep.subr.bf16.mxu0 0
    %877 = vmatpush1.bf16.msra.mxu0 0
    %878 = vmatprep.mubr.bf16.mxu0 0
    %879 = vmatmul.mubr.bf16.gmra.mrb[0].mxu0 %v774
    %v880 = vpop.f32.mrb[0].mxu0
    %v881 = vadd.f32 %v796, %v880
    %v882 = vpop.f32.mrb[0].mxu0
    %v883 = vpop.f32.mrb[0].mxu0
    %v884 = vadd.f32 %v796, %v883
    %v885 = vpop.f32.mrb[0].mxu0
    %886 = vdwg.mxu0
    %v887 = vmax.f32 %v881, 0.0
    %v888 = vmax.f32 %v884, 0.0
    %v889 = vpack.c.bf16 %v888, %v887
    %v890 = vld [vmem:[%s5] sm:$0xff]
    %v891 = vld [vmem:[%s5 + $0x8] sm:$0xff]
    %v892 = vld [vmem:[%s5 + $0x10] sm:$0xff]
    %v893 = vld [vmem:[%s5 + $0x18] sm:$0xff]
    %v894 = vld [vmem:[%s5 + $0x20] sm:$0xff]
    %v895 = vld [vmem:[%s5 + $0x28] sm:$0xff]
    %v896 = vld [vmem:[%s5 + $0x30] sm:$0xff]
    %v897 = vld [vmem:[%s5 + $0x38] sm:$0xff]
    %v898 = vld [vmem:[%s5 + $0x40] sm:$0xff]
    %v899 = vld [vmem:[%s5 + $0x48] sm:$0xff]
    %v900 = vld [vmem:[%s5 + $0x50] sm:$0xff]
    %v901 = vld [vmem:[%s5 + $0x58] sm:$0xff]
    %v902 = vld [vmem:[%s5 + $0x60] sm:$0xff]
    %v903 = vld [vmem:[%s5 + $0x68] sm:$0xff]
    %v904 = vld [vmem:[%s5 + $0x70] sm:$0xff]
    %v905 = vld [vmem:[%s5 + $0x78] sm:$0xff]
    %v906 = vld [vmem:[%s6] sm:$0x3]
    %v908 = vlaneseq
    %v909 = vshrl.u32 %v908, 7
    %v910 = vsub.s32 0, %v909
    %v911 = vrot.slane %v906, %v910
    %v912 = vlaneseq
    %v913 = vshrl.u32 %v912, 7
    %v914 = vsub.s32 1, %v913
    %v915 = vrot.slane %v906, %v914
    %v934 = vunpack.c.l.b16 %v890
    %v935 = vunpack.c.h.b16 %v890
    %v936 = vunpack.c.l.b16 %v891
    %v937 = vunpack.c.h.b16 %v891
    %v938 = vunpack.c.l.b16 %v892
    %v939 = vunpack.c.h.b16 %v892
    %v940 = vunpack.c.l.b16 %v893
    %v941 = vunpack.c.h.b16 %v893
    %v942 = vunpack.c.l.b16 %v894
    %v943 = vunpack.c.h.b16 %v894
    %v944 = vunpack.c.l.b16 %v895
    %v945 = vunpack.c.h.b16 %v895
    %v946 = vunpack.c.l.b16 %v896
    %v947 = vunpack.c.h.b16 %v896
    %v948 = vunpack.c.l.b16 %v897
    %v949 = vunpack.c.h.b16 %v897
    %v950 = vunpack.c.l.b16 %v898
    %v951 = vunpack.c.h.b16 %v898
    %v952 = vunpack.c.l.b16 %v899
    %v953 = vunpack.c.h.b16 %v899
    %v954 = vunpack.c.l.b16 %v900
    %v955 = vunpack.c.h.b16 %v900
    %v956 = vunpack.c.l.b16 %v901
    %v957 = vunpack.c.h.b16 %v901
    %v958 = vunpack.c.l.b16 %v902
    %v959 = vunpack.c.h.b16 %v902
    %v960 = vunpack.c.l.b16 %v903
    %v961 = vunpack.c.h.b16 %v903
    %v962 = vunpack.c.l.b16 %v904
    %v963 = vunpack.c.h.b16 %v904
    %v964 = vunpack.c.l.b16 %v905
    %v965 = vunpack.c.h.b16 %v905
    %v966 = vpack.c.b16 %v936, %v934
    %v967 = vpack.c.b16 %v937, %v935
    %v968 = vpack.c.b16 %v940, %v938
    %v969 = vpack.c.b16 %v941, %v939
    %v970 = vpack.c.b16 %v944, %v942
    %v971 = vpack.c.b16 %v945, %v943
    %v972 = vpack.c.b16 %v948, %v946
    %v973 = vpack.c.b16 %v949, %v947
    %v974 = vpack.c.b16 %v952, %v950
    %v975 = vpack.c.b16 %v953, %v951
    %v976 = vpack.c.b16 %v956, %v954
    %v977 = vpack.c.b16 %v957, %v955
    %v978 = vpack.c.b16 %v960, %v958
    %v979 = vpack.c.b16 %v961, %v959
    %v980 = vpack.c.b16 %v964, %v962
    %v981 = vpack.c.b16 %v965, %v963
    %998 = vmatprep.subr.bf16.mxu0 %v967
    %999 = vmatpush1.bf16.msra.mxu0 %v966
    %1000 = vmatprep.subr.bf16.mxu0 %v969
    %1001 = vmatpush1.bf16.msra.mxu0 %v968
    %1002 = vmatprep.subr.bf16.mxu0 %v971
    %1003 = vmatpush1.bf16.msra.mxu0 %v970
    %1004 = vmatprep.subr.bf16.mxu0 %v973
    %1005 = vmatpush1.bf16.msra.mxu0 %v972
    %1006 = vmatprep.subr.bf16.mxu0 %v975
    %1007 = vmatpush1.bf16.msra.mxu0 %v974
    %1008 = vmatprep.subr.bf16.mxu0 %v977
    %1009 = vmatpush1.bf16.msra.mxu0 %v976
    %1010 = vmatprep.subr.bf16.mxu0 %v979
    %1011 = vmatpush1.bf16.msra.mxu0 %v978
    %1012 = vmatprep.subr.bf16.mxu0 %v981
    %1013 = vmatpush1.bf16.msra.mxu0 %v980
    %1014 = vmatprep.subr.bf16.mxu0 0
    %1015 = vmatpush1.bf16.msra.mxu0 0
    %1016 = vmatprep.subr.bf16.mxu0 0
    %1017 = vmatpush1.bf16.msra.mxu0 0
    %1018 = vmatprep.subr.bf16.mxu0 0
    %1019 = vmatpush1.bf16.msra.mxu0 0
    %1020 = vmatprep.subr.bf16.mxu0 0
    %1021 = vmatpush1.bf16.msra.mxu0 0
    %1022 = vmatprep.subr.bf16.mxu0 0
    %1023 = vmatpush1.bf16.msra.mxu0 0
    %1024 = vmatprep.subr.bf16.mxu0 0
    %1025 = vmatpush1.bf16.msra.mxu0 0
    %1026 = vmatprep.subr.bf16.mxu0 0
    %1027 = vmatpush1.bf16.msra.mxu0 0
    %1028 = vmatprep.subr.bf16.mxu0 0
    %1029 = vmatpush1.bf16.msra.mxu0 0
    %1030 = vmatprep.mubr.bf16.mxu0 0
    %1031 = vmatmul.mubr.bf16.gmra.mrb[0].mxu0 %v889
    %v1032 = vpop.f32.mrb[0].mxu0
    %v1033 = vadd.f32 %v911, %v1032
    %v1034 = vpop.f32.mrb[0].mxu0
    %v1035 = vadd.f32 %v915, %v1034
    %v1036 = vpop.f32.mrb[0].mxu0
    %v1037 = vadd.f32 %v911, %v1036
    %v1038 = vpop.f32.mrb[0].mxu0
    %v1039 = vadd.f32 %v915, %v1038
    %1040 = vdwg.mxu0
    %1041 = vst [vmem:[%s7] sm:$0xff] %v1033
    %1042 = vst [vmem:[%s7 + $0x8] sm:$0xff] %v1035
    %1043 = vst [vmem:[%s7 + $0x10] sm:$0xff] %v1037
    %1044 = vst [vmem:[%s7 + $0x18] sm:$0xff] %v1039
    // Predicated region
    $region34: #{normalnn_forward.1} parent=1 // pred_check
      _
    $region35: #{normalnn_forward.1} parent=1 // pred_check_branch
      %1046 = sbr.rel (0) target = $region37
    $region36: #{normalnn_forward.1} parent=1 // pred_region
      _
    $region37: #{normalnn_forward.1} parent=1 // pred_fallthru
      _
    // Predicated region
    $region38: #{normalnn_forward.1} parent=1 // pred_check
      _
    $region39: #{normalnn_forward.1} parent=1 // pred_check_branch
      %1048 = sbr.rel (0) target = $region41
    $region40: #{normalnn_forward.1} parent=1 // pred_region
      _
    $region41: #{normalnn_forward.1} parent=1 // pred_fallthru
      _
    %1049 = vsyncpa [#allocation3], 1

</llo_original>
